<compile_context>
chip_gen: v7x
topology: tpu7x:2x2x1
jax: 0.10.0
libtpu: 0.0.40
codegen_flags: <defaults>
</compile_context>

<pallas_src>
import functools

import jax
import jax.numpy as jnp
from jax.experimental import pallas as pl
from jax.experimental.pallas import tpu as pltpu


def _round_up(n, m):
    return ((n + m - 1) // m) * m


def _mlp_kernel(x_ref, *refs, n_hidden):
    """Fused MLP forward for one batch tile.

    refs = (w1, b1, ..., w_nh, b_nh, w_head(1,F), b_head(1,1), out_ref(1,T))
    """
    out_ref = refs[-1]
    params = refs[:-1]

    def mm(a, b, dims):
        # Operands are matched to the narrower dtype (bf16 when weights were
        # pre-cast in the wrapper) so the MXU runs in its native dtype;
        # accumulation is always f32.
        if a.dtype != b.dtype:
            tgt = a.dtype if a.dtype.itemsize < b.dtype.itemsize else b.dtype
            a = a.astype(tgt)
            b = b.astype(tgt)
        return jax.lax.dot_general(
            a, b, dimension_numbers=(dims, ((), ())),
            preferred_element_type=jnp.float32)

    h = x_ref[...]                                          # (T, D)
    for i in range(n_hidden):
        w = params[2 * i][...]                              # (in, out)
        b = params[2 * i + 1][...]                          # (1, out), f32
        h = mm(h, w, ((1,), (0,))) + b.astype(jnp.float32)  # (T, out) f32, MXU
        h = jnp.maximum(h, 0.0)                             # ReLU, VPU

    # Head Linear(F, 1): contract dim_ff of the (1, F) weight row against
    # dim_ff of h, producing a lane-dense (1, T) slab directly (batch on
    # lanes) -- no (T, 1) relayout before the store.
    # TODO(synk): if a bundle dump at large F shows an XLU transpose of (T, F)
    # here, switch to h @ w_head(F, 1) plus a single (T,1)->(1,T) relayout.
    w_head = params[2 * n_hidden][...]                      # (1, F)
    b_head = params[2 * n_hidden + 1][...]                  # (1, 1), f32
    out = mm(w_head, h, ((1,), (1,)))                       # (1, T) f32
    out_ref[...] = (out + b_head.astype(jnp.float32)).astype(out_ref.dtype)


def baseline_network_forward(x, params, *, max_batch_tile=1024, mxu_dtype=None):
    """params: list of (w, b) with w: (in, out), b: (1, out). Returns (B, 1)."""
    B, D = x.shape
    n_layers = len(params)
    if n_layers < 2:
        raise ValueError("Zero-layer perceptron? are you fkn kidding me?")
    n_hidden = n_layers - 1
    F = params[0][0].shape[1]                               # dim_feedforward

    # Pre-cast weights ONCE in the wrapper (not per grid step in the kernel).
    # Biases stay f32 so the f32-accumulated bias add keeps full precision.
    head_w, head_b = params[-1]
    flat = []
    for w, b in params[:-1]:
        flat += [w if mxu_dtype is None else w.astype(mxu_dtype),
                 b.astype(jnp.float32)]
    hw = head_w.reshape(1, -1)                              # (F, 1) -> (1, F)
    flat += [hw if mxu_dtype is None else hw.astype(mxu_dtype),
             head_b.reshape(1, 1).astype(jnp.float32)]

    param_bytes = sum(int(a.size) * a.dtype.itemsize for a in flat)
    x_itemsize = x.dtype.itemsize

    # --- batch tile selection ------------------------------------------------
    b128 = _round_up(B, 128)
    tile = min(_round_up(max_batch_tile, 128), b128)
    if b128 >= 256:
        # Guarantee >=2 grid steps so the parallel axis can use both v7x TCs.
        tile = min(tile, _round_up(pl.cdiv(B, 2), 128))

    def _vmem_need(t):
        return (2 * t * D * x_itemsize        # double-buffered x tile
                + 2 * t * 4                   # double-buffered (1, t) out tile
                + 2 * t * F * 4               # ~2 live f32 activation slabs
                + param_bytes)                # single-buffered resident params

    vmem_budget = 40 << 20                    # headroom under v7x's 64 MiB
    while tile > 128 and _vmem_need(tile) > vmem_budget:
        tile -= 128
    # TODO(synk): if F is large enough that resident f32 FxF weights alone blow
    # the budget (F >= ~2048 on v7x), stream them over a hidden-dim grid axis
    # with pl.Buffered(2) or store them bf16 instead of keeping them resident.

    n_steps = pl.cdiv(B, tile)
    b_out = n_steps * tile                    # output kept fully in-bounds

    in_specs = [pl.BlockSpec((tile, D), lambda i: (i, 0))]
    # Constant-index, single-buffered: copied to VMEM once, resident across
    # the whole grid (no double-buffering of constants).
    in_specs += [pl.BlockSpec(a.shape, lambda i: (0, 0),
                              pipeline_mode=pl.Buffered(1)) for a in flat]

    flops = 2 * B * (D * F + max(n_hidden - 1, 0) * F * F + F)
    bytes_accessed = (int(x.size) * x_itemsize + param_bytes
                      + b_out * x_itemsize)

    out = pl.pallas_call(
        functools.partial(_mlp_kernel, n_hidden=n_hidden),
        out_shape=jax.ShapeDtypeStruct((1, b_out), x.dtype),
        grid=(n_steps,),
        in_specs=in_specs,
        out_specs=pl.BlockSpec((1, tile), lambda i: (0, i)),
        compiler_params=pltpu.CompilerParams(
            dimension_semantics=("parallel",),
            vmem_limit_bytes=int(min(max(2 * _vmem_need(tile), 32 << 20),
                                     64 << 20))),
        cost_estimate=pl.CostEstimate(
            flops=flops, transcendentals=0, bytes_accessed=bytes_accessed),
    )(x, *flat)

    # Lane-dense (1, b_out) slab -> (B, 1); padded garbage rows sliced off.
    return out.reshape(b_out, 1)[:B]


def init_baseline_params(key, state_dim, dim_feedforward, nlayers,
                         dtype=jnp.float32):
    """Deterministic init matching BaselineNetwork.__init__ shapes."""
    if nlayers < 1:
        raise ValueError("Zero-layer perceptron? are you fkn kidding me?")
    dims = [state_dim] + [dim_feedforward] * nlayers + [1]
    params = []
    for d_in, d_out in zip(dims[:-1], dims[1:]):
        key, kw, kb = jax.random.split(key, 3)
        bound = 1.0 / jnp.sqrt(d_in)  # torch.nn.Linear default init range
        w = jax.random.uniform(kw, (d_in, d_out), dtype, -bound, bound)
        b = jax.random.uniform(kb, (1, d_out), dtype, -bound, bound)
        params.append((w, b))
    return params


def _reference_forward(x, params):
    h = x
    n = len(params)
    for i, (w, b) in enumerate(params):
        h = h @ w + b
        if i < n - 1:
            h = jnp.maximum(h, 0.0)
    return h


if __name__ == "__main__":
    key = jax.random.PRNGKey(0)
    batch, state_dim, dim_feedforward, nlayers = 16, 16, 32, 2

    k_x, k_p, k_x2 = jax.random.split(key, 3)
    x = jax.random.normal(k_x, (batch, state_dim), jnp.float32)
    params = init_baseline_params(k_p, state_dim, dim_feedforward, nlayers)

    out = jax.block_until_ready(baseline_network_forward(x, params))
    ref = _reference_forward(x, params)
    assert out.shape == (batch, 1)
    assert jnp.allclose(out, ref, atol=1e-5, rtol=1e-5), "mismatch (small batch)"

    # Non-divisible batch: exercises the partial trailing block (no wrapper-side
    # pad copy of x) and a 2-step parallel grid (both TensorCores on v7x).
    x2 = jax.random.normal(k_x2, (300, state_dim), jnp.float32)
    out2 = jax.block_until_ready(baseline_network_forward(x2, params))
    ref2 = _reference_forward(x2, params)
    assert out2.shape == (300, 1)
    assert jnp.allclose(out2, ref2, atol=1e-5, rtol=1e-5), "mismatch (ragged batch)"

    # bf16-MXU path: weights pre-cast once in the wrapper; loosened tolerance
    # (bf16 operands, f32 accumulation).
    out3 = jax.block_until_ready(
        baseline_network_forward(x2, params, mxu_dtype=jnp.bfloat16))
    assert out3.shape == (300, 1)
    assert jnp.allclose(out3, ref2, atol=1e-1, rtol=1e-1), "mismatch (bf16 MXU)"

    print("KERNEL_OK")
</pallas_src>

<mosaic_0001>
module attributes {stable_mosaic.version = 11 : i64} {
  func.func @_mlp_kernel(%arg0: i32, %arg1: memref<128x16xf32, #tpu.memory_space<vmem>>, %arg2: memref<16x32xf32, #tpu.memory_space<vmem>>, %arg3: memref<1x32xf32, #tpu.memory_space<vmem>>, %arg4: memref<32x32xf32, #tpu.memory_space<vmem>>, %arg5: memref<1x32xf32, #tpu.memory_space<vmem>>, %arg6: memref<1x32xf32, #tpu.memory_space<vmem>>, %arg7: memref<1x1xf32, #tpu.memory_space<vmem>>, %arg8: memref<1x128xf32, #tpu.memory_space<vmem>>) attributes {dimension_semantics = [#tpu.dimension_semantics<parallel>], iteration_bounds = array<i64: 1>, scalar_prefetch = 0 : i64, scratch_operands = 0 : i64, tpu.core_type = #tpu.core_type<tc>, window_params = [{transform_indices = @transform_0, window_bounds = array<i64: 128, 16>}, {pipeline_mode = #tpu.pipeline_mode<synchronous>, transform_indices = @transform_1, window_bounds = array<i64: 16, 32>}, {pipeline_mode = #tpu.pipeline_mode<synchronous>, transform_indices = @transform_2, window_bounds = array<i64: 1, 32>}, {pipeline_mode = #tpu.pipeline_mode<synchronous>, transform_indices = @transform_3, window_bounds = array<i64: 32, 32>}, {pipeline_mode = #tpu.pipeline_mode<synchronous>, transform_indices = @transform_4, window_bounds = array<i64: 1, 32>}, {pipeline_mode = #tpu.pipeline_mode<synchronous>, transform_indices = @transform_5, window_bounds = array<i64: 1, 32>}, {pipeline_mode = #tpu.pipeline_mode<synchronous>, transform_indices = @transform_6, window_bounds = array<i64: 1, 1>}, {transform_indices = @transform_7, window_bounds = array<i64: 1, 128>}]} {
    %c0 = arith.constant 0 : index
    %c0_0 = arith.constant 0 : index
    %0 = vector.load %arg1[%c0, %c0_0] : memref<128x16xf32, #tpu.memory_space<vmem>>, vector<128x16xf32>
    %c0_1 = arith.constant 0 : index
    %c0_2 = arith.constant 0 : index
    %1 = vector.load %arg2[%c0_1, %c0_2] : memref<16x32xf32, #tpu.memory_space<vmem>>, vector<16x32xf32>
    %c0_3 = arith.constant 0 : index
    %c0_4 = arith.constant 0 : index
    %2 = vector.load %arg3[%c0_3, %c0_4] : memref<1x32xf32, #tpu.memory_space<vmem>>, vector<1x32xf32>
    %cst = arith.constant dense<0.000000e+00> : vector<128x32xf32>
    %3 = tpu.matmul %0, %1, %cst {dimension_numbers = #tpu.dot_dimension_numbers<[1], [0], [0], [1], [0, 0, 1, 1], [], []>} : vector<128x16xf32>, vector<16x32xf32>, vector<128x32xf32> -> vector<128x32xf32>
    %4 = vector.broadcast %2 : vector<1x32xf32> to vector<128x32xf32>
    %5 = arith.addf %3, %4 : vector<128x32xf32>
    %cst_5 = arith.constant 0.000000e+00 : f32
    %6 = vector.broadcast %cst_5 : f32 to vector<128x32xf32>
    %7 = arith.maximumf %5, %6 : vector<128x32xf32>
    %c0_6 = arith.constant 0 : index
    %c0_7 = arith.constant 0 : index
    %8 = vector.load %arg4[%c0_6, %c0_7] : memref<32x32xf32, #tpu.memory_space<vmem>>, vector<32x32xf32>
    %c0_8 = arith.constant 0 : index
    %c0_9 = arith.constant 0 : index
    %9 = vector.load %arg5[%c0_8, %c0_9] : memref<1x32xf32, #tpu.memory_space<vmem>>, vector<1x32xf32>
    %cst_10 = arith.constant dense<0.000000e+00> : vector<128x32xf32>
    %10 = tpu.matmul %7, %8, %cst_10 {dimension_numbers = #tpu.dot_dimension_numbers<[1], [0], [0], [1], [0, 0, 1, 1], [], []>} : vector<128x32xf32>, vector<32x32xf32>, vector<128x32xf32> -> vector<128x32xf32>
    %11 = vector.broadcast %9 : vector<1x32xf32> to vector<128x32xf32>
    %12 = arith.addf %10, %11 : vector<128x32xf32>
    %cst_11 = arith.constant 0.000000e+00 : f32
    %13 = vector.broadcast %cst_11 : f32 to vector<128x32xf32>
    %14 = arith.maximumf %12, %13 : vector<128x32xf32>
    %c0_12 = arith.constant 0 : index
    %c0_13 = arith.constant 0 : index
    %15 = vector.load %arg6[%c0_12, %c0_13] : memref<1x32xf32, #tpu.memory_space<vmem>>, vector<1x32xf32>
    %c0_14 = arith.constant 0 : index
    %c0_15 = arith.constant 0 : index
    %16 = vector.load %arg7[%c0_14, %c0_15] : memref<1x1xf32, #tpu.memory_space<vmem>>, vector<1x1xf32>
    %cst_16 = arith.constant dense<0.000000e+00> : vector<1x128xf32>
    %17 = tpu.matmul %15, %14, %cst_16 {dimension_numbers = #tpu.dot_dimension_numbers<[1], [1], [0], [0], [0, 0, 1, 0], [], []>} : vector<1x32xf32>, vector<128x32xf32>, vector<1x128xf32> -> vector<1x128xf32>
    %18 = vector.broadcast %16 : vector<1x1xf32> to vector<1x128xf32>
    %19 = arith.addf %17, %18 : vector<1x128xf32>
    %c0_17 = arith.constant 0 : index
    %c0_18 = arith.constant 0 : index
    %20 = vector.load %arg8[%c0_17, %c0_18] : memref<1x128xf32, #tpu.memory_space<vmem>>, vector<1x128xf32>
    tpu.vector_store %arg8[%c0_17, %c0_18], %19 {strides = array<i32>} : memref<1x128xf32, #tpu.memory_space<vmem>>, vector<1x128xf32>,
    return
  }
  func.func @transform_0(%arg0: i32) -> (i32, i32) {
    %c0_i32 = arith.constant 0 : i32
    %c0_i32_0 = arith.constant 0 : i32
    return %arg0, %c0_i32 : i32, i32
  }
  func.func @transform_1(%arg0: i32) -> (i32, i32) {
    %c0_i32 = arith.constant 0 : i32
    %c0_i32_0 = arith.constant 0 : i32
    %c0_i32_1 = arith.constant 0 : i32
    return %c0_i32, %c0_i32_0 : i32, i32
  }
  func.func @transform_2(%arg0: i32) -> (i32, i32) {
    %c0_i32 = arith.constant 0 : i32
    %c0_i32_0 = arith.constant 0 : i32
    %c0_i32_1 = arith.constant 0 : i32
    return %c0_i32, %c0_i32_0 : i32, i32
  }
  func.func @transform_3(%arg0: i32) -> (i32, i32) {
    %c0_i32 = arith.constant 0 : i32
    %c0_i32_0 = arith.constant 0 : i32
    %c0_i32_1 = arith.constant 0 : i32
    return %c0_i32, %c0_i32_0 : i32, i32
  }
  func.func @transform_4(%arg0: i32) -> (i32, i32) {
    %c0_i32 = arith.constant 0 : i32
    %c0_i32_0 = arith.constant 0 : i32
    %c0_i32_1 = arith.constant 0 : i32
    return %c0_i32, %c0_i32_0 : i32, i32
  }
  func.func @transform_5(%arg0: i32) -> (i32, i32) {
    %c0_i32 = arith.constant 0 : i32
    %c0_i32_0 = arith.constant 0 : i32
    %c0_i32_1 = arith.constant 0 : i32
    return %c0_i32, %c0_i32_0 : i32, i32
  }
  func.func @transform_6(%arg0: i32) -> (i32, i32) {
    %c0_i32 = arith.constant 0 : i32
    %c0_i32_0 = arith.constant 0 : i32
    %c0_i32_1 = arith.constant 0 : i32
    return %c0_i32, %c0_i32_0 : i32, i32
  }
  func.func @transform_7(%arg0: i32) -> (i32, i32) {
    %c0_i32 = arith.constant 0 : i32
    %c0_i32_0 = arith.constant 0 : i32
    return %c0_i32, %arg0 : i32, i32
  }
}

</mosaic_0001>

<llo_original>
// kernel: tpu_custom_call.1
$region0: #{tpu_custom_call.1}
  #allocation0 [shape = 'u32[]', space=smem, size = 0x4, offset = 0x4, fixed_abs, tag = 'smem constant byte address 0x4 - core index']
  #allocation1 [shape = 'u32[144,128]{1,0:T(1,128)}', space=vmem, size = 0x12000, scoped, tag = 'internal scratch']
  #allocation2 [shape = 'f32[1,1]{1,0:T(1,128)S(1)}', space=vmem, size = 0x200, scoped, tag = 'scoped memory for tpu_custom_call.1']
  %s0 = inlined_call_operand.hbm [shape: f32[16,16], index: 0, kind: input, shape index: {}]
  %s1 = inlined_call_operand.hbm [shape: f32[16,32], index: 1, kind: input, shape index: {}]
  %s2 = inlined_call_operand.vmem [shape: f32[1,32], index: 2, kind: input, shape index: {}]
  %s3 = inlined_call_operand.hbm [shape: f32[32,32], index: 3, kind: input, shape index: {}]
  %s4 = inlined_call_operand.vmem [shape: f32[1,32], index: 4, kind: input, shape index: {}]
  %s5 = inlined_call_operand.vmem [shape: f32[1,32], index: 5, kind: input, shape index: {}]
  %s6 = inlined_call_operand.<no memory space> [shape: f32[1,1], index: 6, kind: input, shape index: {}]
  %s7 = inlined_call_operand.hbm [shape: f32[1,128], index: 7, kind: output, shape index: {}]
  %s8 = sld [smem:[#allocation0]]
  $region50: #{tpu_custom_call.1} parent=0
    _
  %s10 = ssub.s32 1, %s8
  %s11 = scalar_select 0, %s10, %s8
  %v12 = vstv %s6
  %13 = vst [vmem:[#allocation2] sm:$0x1] %v12
  $region1: #{tpu_custom_call.1} parent=0
    #allocation3 [shape = 'u8[65536]{0}', space=vmem, size = 0x10000, scoped, tag = 'input window, operand 0, single buffered']
    #allocation4 [shape = 's32[1]{0}', space=sflag, size = 0x4, scoped, tag = 'scoped memory for tpu_custom_call.1']
    #allocation5 [shape = 's32[1]{0}', space=sflag, size = 0x4, scoped, tag = 'scoped memory for tpu_custom_call.1']
    #allocation6 [shape = 'u8[8192]{0}', space=vmem, size = 0x2000, scoped, tag = 'input window, operand 1, single buffered']
    #allocation7 [shape = 's32[1]{0}', space=sflag, size = 0x4, scoped, tag = 'scoped memory for tpu_custom_call.1']
    #allocation8 [shape = 'u8[16384]{0}', space=vmem, size = 0x4000, scoped, tag = 'input window, operand 3, single buffered']
    #allocation9 [shape = 'u8[512]{0}', space=vmem, size = 0x400, scoped, tag = 'output window, operand 0, single buffered']
    %14 = vsyncpa [#allocation4], 0
    %15 = vsyncpa [#allocation7], 0
    %16 = vsyncpa [#allocation5], 0
    // Predicated region
    $region2: #{tpu_custom_call.1} parent=1 // pred_check
      _
    $region3: #{tpu_custom_call.1} parent=1 // pred_check_branch
      %18 = sbr.rel (0) target = $region5
    $region4: #{tpu_custom_call.1} parent=1 // pred_region
      %s20 = ssub.s32 2048, 256
      %21 = vsyncadd [#allocation4], %s20
      %s22 = sshll.u32 [#allocation3], 4
      %s23 = int_to_ptr.vmem [resolvable:$true] %s22
      %28 = dma.hbm_to_vmem [thread:$0]  %s0, 256, %s23, [#allocation4], 128, 128, 8
    $region5: #{tpu_custom_call.1} parent=1 // pred_fallthru
      _
    // Predicated region
    $region6: #{tpu_custom_call.1} parent=1 // pred_check
      _
    $region7: #{tpu_custom_call.1} parent=1 // pred_check_branch
      %30 = sbr.rel (0) target = $region9
    $region8: #{tpu_custom_call.1} parent=1 // pred_region
      %s32 = ssub.s32 256, 256
      %33 = vsyncadd [#allocation7], %s32
      %s34 = sshll.u32 [#allocation6], 4
      %s35 = int_to_ptr.vmem [resolvable:$true] %s34
      %40 = dma.hbm_to_vmem [thread:$0]  %s1, 256, %s35, [#allocation7], 128, 128, 8
    $region9: #{tpu_custom_call.1} parent=1 // pred_fallthru
      _
    // Predicated region
    $region10: #{tpu_custom_call.1} parent=1 // pred_check
      _
    $region11: #{tpu_custom_call.1} parent=1 // pred_check_branch
      %42 = sbr.rel (0) target = $region13
    $region12: #{tpu_custom_call.1} parent=1 // pred_region
      _
    $region13: #{tpu_custom_call.1} parent=1 // pred_fallthru
      _
    // Predicated region
    $region14: #{tpu_custom_call.1} parent=1 // pred_check
      _
    $region15: #{tpu_custom_call.1} parent=1 // pred_check_branch
      %44 = sbr.rel (0) target = $region17
    $region16: #{tpu_custom_call.1} parent=1 // pred_region
      %s46 = ssub.s32 512, 512
      %47 = vsyncadd [#allocation7], %s46
      %s48 = sshll.u32 [#allocation8], 4
      %s49 = int_to_ptr.vmem [resolvable:$true] %s48
      %54 = dma.hbm_to_vmem [thread:$0]  %s3, 512, %s49, [#allocation7], 128, 128, 8
    $region17: #{tpu_custom_call.1} parent=1 // pred_fallthru
      _
    // Predicated region
    $region18: #{tpu_custom_call.1} parent=1 // pred_check
      _
    $region19: #{tpu_custom_call.1} parent=1 // pred_check_branch
      %56 = sbr.rel (0) target = $region21
    $region20: #{tpu_custom_call.1} parent=1 // pred_region
      _
    $region21: #{tpu_custom_call.1} parent=1 // pred_fallthru
      _
    // Predicated region
    $region22: #{tpu_custom_call.1} parent=1 // pred_check
      _
    $region23: #{tpu_custom_call.1} parent=1 // pred_check_branch
      %58 = sbr.rel (0) target = $region25
    $region24: #{tpu_custom_call.1} parent=1 // pred_region
      _
    $region25: #{tpu_custom_call.1} parent=1 // pred_fallthru
      _
    // Predicated region
    $region26: #{tpu_custom_call.1} parent=1 // pred_check
      _
    $region27: #{tpu_custom_call.1} parent=1 // pred_check_branch
      %60 = sbr.rel (0) target = $region29
    $region28: #{tpu_custom_call.1} parent=1 // pred_region
      _
    $region29: #{tpu_custom_call.1} parent=1 // pred_fallthru
      _
    // Predicated region
    $region30: #{tpu_custom_call.1} parent=1 // pred_check
      _
    $region31: #{tpu_custom_call.1} parent=1 // pred_check_branch
      %62 = sbr.rel (0) target = $region33
    $region32: #{tpu_custom_call.1} parent=1 // pred_region
      %63 = dma.done [#allocation4], 2048
    $region33: #{tpu_custom_call.1} parent=1 // pred_fallthru
      _
    // Predicated region
    $region34: #{tpu_custom_call.1} parent=1 // pred_check
      _
    $region35: #{tpu_custom_call.1} parent=1 // pred_check_branch
      %65 = sbr.rel (0) target = $region37
    $region36: #{tpu_custom_call.1} parent=1 // pred_region
      %66 = dma.done [#allocation7], 256
    $region37: #{tpu_custom_call.1} parent=1 // pred_fallthru
      _
    // Predicated region
    $region38: #{tpu_custom_call.1} parent=1 // pred_check
      _
    $region39: #{tpu_custom_call.1} parent=1 // pred_check_branch
      %68 = sbr.rel (0) target = $region41
    $region40: #{tpu_custom_call.1} parent=1 // pred_region
      %69 = dma.done [#allocation7], 512
    $region41: #{tpu_custom_call.1} parent=1 // pred_fallthru
      _
    %v70 = vld [vmem:[#allocation3] sm:$0xff]
    %v71 = vld [vmem:[#allocation3 + $0x8] sm:$0xff]
    %v72 = vld [vmem:[#allocation3 + $0x10] sm:$0xff]
    %v73 = vld [vmem:[#allocation3 + $0x18] sm:$0xff]
    %v74 = vld [vmem:[#allocation3 + $0x20] sm:$0xff]
    %v75 = vld [vmem:[#allocation3 + $0x28] sm:$0xff]
    %v76 = vld [vmem:[#allocation3 + $0x30] sm:$0xff]
    %v77 = vld [vmem:[#allocation3 + $0x38] sm:$0xff]
    %v78 = vld [vmem:[#allocation3 + $0x40] sm:$0xff]
    %v79 = vld [vmem:[#allocation3 + $0x48] sm:$0xff]
    %v80 = vld [vmem:[#allocation3 + $0x50] sm:$0xff]
    %v81 = vld [vmem:[#allocation3 + $0x58] sm:$0xff]
    %v82 = vld [vmem:[#allocation3 + $0x60] sm:$0xff]
    %v83 = vld [vmem:[#allocation3 + $0x68] sm:$0xff]
    %v84 = vld [vmem:[#allocation3 + $0x70] sm:$0xff]
    %v85 = vld [vmem:[#allocation3 + $0x78] sm:$0xff]
    %v86 = vld [vmem:[#allocation6] sm:$0xff]
    %v87 = vld [vmem:[#allocation6 + $0x8] sm:$0xff]
    %v88 = vld [vmem:[%s2] sm:$0x1]
    %v90 = vlaneseq
    %v91 = vshrl.u32 %v90, 7
    %v92 = vsub.s32 0, %v91
    %v93 = vrot.slane %v88, %v92
    %vm95 = vcmask 130048
    %v97 = vsel %vm95, %v70, 0
    %v100 = vsel %vm95, %v71, 0
    %v103 = vsel %vm95, %v72, 0
    %v106 = vsel %vm95, %v73, 0
    %v109 = vsel %vm95, %v74, 0
    %v112 = vsel %vm95, %v75, 0
    %v115 = vsel %vm95, %v76, 0
    %v118 = vsel %vm95, %v77, 0
    %v121 = vsel %vm95, %v78, 0
    %v124 = vsel %vm95, %v79, 0
    %v127 = vsel %vm95, %v80, 0
    %v130 = vsel %vm95, %v81, 0
    %v133 = vsel %vm95, %v82, 0
    %v136 = vsel %vm95, %v83, 0
    %v139 = vsel %vm95, %v84, 0
    %v142 = vsel %vm95, %v85, 0
    %144 = vmatprep.subr.mxu0 0.0
    %145 = vmatpush1.msra.mxu0 %v86
    %146 = vmatprep.subr.mxu0 0.0
    %147 = vmatpush1.msra.mxu0 %v87
    %148 = vmatprep.subr.mxu0 0.0
    %149 = vmatpush1.msra.mxu0 0.0
    %150 = vmatprep.subr.mxu0 0.0
    %151 = vmatpush1.msra.mxu0 0.0
    %152 = vmatprep.subr.mxu0 0.0
    %153 = vmatpush1.msra.mxu0 0.0
    %154 = vmatprep.subr.mxu0 0.0
    %155 = vmatpush1.msra.mxu0 0.0
    %156 = vmatprep.subr.mxu0 0.0
    %157 = vmatpush1.msra.mxu0 0.0
    %158 = vmatprep.subr.mxu0 0.0
    %159 = vmatpush1.msra.mxu0 0.0
    %160 = vmatprep.subr.mxu0 0.0
    %161 = vmatpush1.msra.mxu0 0.0
    %162 = vmatprep.subr.mxu0 0.0
    %163 = vmatpush1.msra.mxu0 0.0
    %164 = vmatprep.subr.mxu0 0.0
    %165 = vmatpush1.msra.mxu0 0.0
    %166 = vmatprep.subr.mxu0 0.0
    %167 = vmatpush1.msra.mxu0 0.0
    %168 = vmatprep.subr.mxu0 0.0
    %169 = vmatpush1.msra.mxu0 0.0
    %170 = vmatprep.subr.mxu0 0.0
    %171 = vmatpush1.msra.mxu0 0.0
    %172 = vmatprep.subr.mxu0 0.0
    %173 = vmatpush1.msra.mxu0 0.0
    %174 = vmatprep.subr.mxu0 0.0
    %175 = vmatpush1.msra.mxu0 0.0
    %176 = vmatprep.subr.mxu0 0.0
    %177 = vmatpush1.msra.mxu0 0.0
    %178 = vmatprep.subr.mxu0 0.0
    %179 = vmatpush1.msra.mxu0 0.0
    %180 = vmatprep.subr.mxu0 0.0
    %181 = vmatpush1.msra.mxu0 0.0
    %182 = vmatprep.subr.mxu0 0.0
    %183 = vmatpush1.msra.mxu0 0.0
    %184 = vmatprep.subr.mxu0 0.0
    %185 = vmatpush1.msra.mxu0 0.0
    %186 = vmatprep.subr.mxu0 0.0
    %187 = vmatpush1.msra.mxu0 0.0
    %188 = vmatprep.subr.mxu0 0.0
    %189 = vmatpush1.msra.mxu0 0.0
    %190 = vmatprep.subr.mxu0 0.0
    %191 = vmatpush1.msra.mxu0 0.0
    %192 = vmatprep.subr.mxu0 0.0
    %193 = vmatpush1.msra.mxu0 0.0
    %194 = vmatprep.subr.mxu0 0.0
    %195 = vmatpush1.msra.mxu0 0.0
    %196 = vmatprep.subr.mxu0 0.0
    %197 = vmatpush1.msra.mxu0 0.0
    %198 = vmatprep.subr.mxu0 0.0
    %199 = vmatpush1.msra.mxu0 0.0
    %200 = vmatprep.subr.mxu0 0.0
    %201 = vmatpush1.msra.mxu0 0.0
    %202 = vmatprep.subr.mxu0 0.0
    %203 = vmatpush1.msra.mxu0 0.0
    %204 = vmatprep.subr.mxu0 0.0
    %205 = vmatpush1.msra.mxu0 0.0
    %206 = vmatprep.subr.mxu0 0.0
    %207 = vmatpush1.msra.mxu0 0.0
    %208 = vmatprep.mubr.f32.mxu0 0.0
    %209 = vmatmul.mubr.f32.gmra.mrb[0].mxu0 %v97
    %v210 = vpop.f32.mrb[0].mxu0
    %v211 = vadd.f32 %v93, %v210
    %v212 = vpop.f32.mrb[0].mxu0
    %213 = vmatprep.mubr.f32.mxu0 0.0
    %214 = vmatmul.mubr.f32.gmra.mrb[0].mxu0 %v100
    %v215 = vpop.f32.mrb[0].mxu0
    %v216 = vadd.f32 %v93, %v215
    %v217 = vpop.f32.mrb[0].mxu0
    %218 = vmatprep.mubr.f32.mxu0 0.0
    %219 = vmatmul.mubr.f32.gmra.mrb[0].mxu0 %v103
    %v220 = vpop.f32.mrb[0].mxu0
    %v221 = vadd.f32 %v93, %v220
    %v222 = vpop.f32.mrb[0].mxu0
    %223 = vmatprep.mubr.f32.mxu0 0.0
    %224 = vmatmul.mubr.f32.gmra.mrb[0].mxu0 %v106
    %v225 = vpop.f32.mrb[0].mxu0
    %v226 = vadd.f32 %v93, %v225
    %v227 = vpop.f32.mrb[0].mxu0
    %228 = vmatprep.mubr.f32.mxu0 0.0
    %229 = vmatmul.mubr.f32.gmra.mrb[0].mxu0 %v109
    %v230 = vpop.f32.mrb[0].mxu0
    %v231 = vadd.f32 %v93, %v230
    %v232 = vpop.f32.mrb[0].mxu0
    %233 = vmatprep.mubr.f32.mxu0 0.0
    %234 = vmatmul.mubr.f32.gmra.mrb[0].mxu0 %v112
    %v235 = vpop.f32.mrb[0].mxu0
    %v236 = vadd.f32 %v93, %v235
    %v237 = vpop.f32.mrb[0].mxu0
    %238 = vmatprep.mubr.f32.mxu0 0.0
    %239 = vmatmul.mubr.f32.gmra.mrb[0].mxu0 %v115
    %v240 = vpop.f32.mrb[0].mxu0
    %v241 = vadd.f32 %v93, %v240
    %v242 = vpop.f32.mrb[0].mxu0
    %243 = vmatprep.mubr.f32.mxu0 0.0
    %244 = vmatmul.mubr.f32.gmra.mrb[0].mxu0 %v118
    %v245 = vpop.f32.mrb[0].mxu0
    %v246 = vadd.f32 %v93, %v245
    %v247 = vpop.f32.mrb[0].mxu0
    %248 = vmatprep.mubr.f32.mxu0 0.0
    %249 = vmatmul.mubr.f32.gmra.mrb[0].mxu0 %v121
    %v250 = vpop.f32.mrb[0].mxu0
    %v251 = vadd.f32 %v93, %v250
    %v252 = vpop.f32.mrb[0].mxu0
    %253 = vmatprep.mubr.f32.mxu0 0.0
    %254 = vmatmul.mubr.f32.gmra.mrb[0].mxu0 %v124
    %v255 = vpop.f32.mrb[0].mxu0
    %v256 = vadd.f32 %v93, %v255
    %v257 = vpop.f32.mrb[0].mxu0
    %258 = vmatprep.mubr.f32.mxu0 0.0
    %259 = vmatmul.mubr.f32.gmra.mrb[0].mxu0 %v127
    %v260 = vpop.f32.mrb[0].mxu0
    %v261 = vadd.f32 %v93, %v260
    %v262 = vpop.f32.mrb[0].mxu0
    %263 = vmatprep.mubr.f32.mxu0 0.0
    %264 = vmatmul.mubr.f32.gmra.mrb[0].mxu0 %v130
    %v265 = vpop.f32.mrb[0].mxu0
    %v266 = vadd.f32 %v93, %v265
    %v267 = vpop.f32.mrb[0].mxu0
    %268 = vmatprep.mubr.f32.mxu0 0.0
    %269 = vmatmul.mubr.f32.gmra.mrb[0].mxu0 %v133
    %v270 = vpop.f32.mrb[0].mxu0
    %v271 = vadd.f32 %v93, %v270
    %v272 = vpop.f32.mrb[0].mxu0
    %273 = vmatprep.mubr.f32.mxu0 0.0
    %274 = vmatmul.mubr.f32.gmra.mrb[0].mxu0 %v136
    %v275 = vpop.f32.mrb[0].mxu0
    %v276 = vadd.f32 %v93, %v275
    %v277 = vpop.f32.mrb[0].mxu0
    %278 = vmatprep.mubr.f32.mxu0 0.0
    %279 = vmatmul.mubr.f32.gmra.mrb[0].mxu0 %v139
    %v280 = vpop.f32.mrb[0].mxu0
    %v281 = vadd.f32 %v93, %v280
    %v282 = vpop.f32.mrb[0].mxu0
    %283 = vmatprep.mubr.f32.mxu0 0.0
    %284 = vmatmul.mubr.f32.gmra.mrb[0].mxu0 %v142
    %v285 = vpop.f32.mrb[0].mxu0
    %v286 = vadd.f32 %v93, %v285
    %v287 = vpop.f32.mrb[0].mxu0
    %288 = vdwg.mxu0
    %v289 = vmax.f32 %v211, 0.0
    %v290 = vmax.f32 %v216, 0.0
    %v291 = vmax.f32 %v221, 0.0
    %v292 = vmax.f32 %v226, 0.0
    %v293 = vmax.f32 %v231, 0.0
    %v294 = vmax.f32 %v236, 0.0
    %v295 = vmax.f32 %v241, 0.0
    %v296 = vmax.f32 %v246, 0.0
    %v297 = vmax.f32 %v251, 0.0
    %v298 = vmax.f32 %v256, 0.0
    %v299 = vmax.f32 %v261, 0.0
    %v300 = vmax.f32 %v266, 0.0
    %v301 = vmax.f32 %v271, 0.0
    %v302 = vmax.f32 %v276, 0.0
    %v303 = vmax.f32 %v281, 0.0
    %v304 = vmax.f32 %v286, 0.0
    %v305 = vld [vmem:[#allocation8] sm:$0xff]
    %v306 = vld [vmem:[#allocation8 + $0x8] sm:$0xff]
    %v307 = vld [vmem:[#allocation8 + $0x10] sm:$0xff]
    %v308 = vld [vmem:[#allocation8 + $0x18] sm:$0xff]
    %v309 = vld [vmem:[%s4] sm:$0x1]
    %v311 = vlaneseq
    %v312 = vshrl.u32 %v311, 7
    %v313 = vsub.s32 0, %v312
    %v314 = vrot.slane %v309, %v313
    %vm316 = vcmask 261120
    %v318 = vsel %vm316, %v289, 0
    %v321 = vsel %vm316, %v290, 0
    %v324 = vsel %vm316, %v291, 0
    %v327 = vsel %vm316, %v292, 0
    %v330 = vsel %vm316, %v293, 0
    %v333 = vsel %vm316, %v294, 0
    %v336 = vsel %vm316, %v295, 0
    %v339 = vsel %vm316, %v296, 0
    %v342 = vsel %vm316, %v297, 0
    %v345 = vsel %vm316, %v298, 0
    %v348 = vsel %vm316, %v299, 0
    %v351 = vsel %vm316, %v300, 0
    %v354 = vsel %vm316, %v301, 0
    %v357 = vsel %vm316, %v302, 0
    %v360 = vsel %vm316, %v303, 0
    %v363 = vsel %vm316, %v304, 0
    %365 = vmatprep.subr.mxu0 0.0
    %366 = vmatpush1.msra.mxu0 %v305
    %367 = vmatprep.subr.mxu0 0.0
    %368 = vmatpush1.msra.mxu0 %v306
    %369 = vmatprep.subr.mxu0 0.0
    %370 = vmatpush1.msra.mxu0 %v307
    %371 = vmatprep.subr.mxu0 0.0
    %372 = vmatpush1.msra.mxu0 %v308
    %373 = vmatprep.subr.mxu0 0.0
    %374 = vmatpush1.msra.mxu0 0.0
    %375 = vmatprep.subr.mxu0 0.0
    %376 = vmatpush1.msra.mxu0 0.0
    %377 = vmatprep.subr.mxu0 0.0
    %378 = vmatpush1.msra.mxu0 0.0
    %379 = vmatprep.subr.mxu0 0.0
    %380 = vmatpush1.msra.mxu0 0.0
    %381 = vmatprep.subr.mxu0 0.0
    %382 = vmatpush1.msra.mxu0 0.0
    %383 = vmatprep.subr.mxu0 0.0
    %384 = vmatpush1.msra.mxu0 0.0
    %385 = vmatprep.subr.mxu0 0.0
    %386 = vmatpush1.msra.mxu0 0.0
    %387 = vmatprep.subr.mxu0 0.0
    %388 = vmatpush1.msra.mxu0 0.0
    %389 = vmatprep.subr.mxu0 0.0
    %390 = vmatpush1.msra.mxu0 0.0
    %391 = vmatprep.subr.mxu0 0.0
    %392 = vmatpush1.msra.mxu0 0.0
    %393 = vmatprep.subr.mxu0 0.0
    %394 = vmatpush1.msra.mxu0 0.0
    %395 = vmatprep.subr.mxu0 0.0
    %396 = vmatpush1.msra.mxu0 0.0
    %397 = vmatprep.subr.mxu0 0.0
    %398 = vmatpush1.msra.mxu0 0.0
    %399 = vmatprep.subr.mxu0 0.0
    %400 = vmatpush1.msra.mxu0 0.0
    %401 = vmatprep.subr.mxu0 0.0
    %402 = vmatpush1.msra.mxu0 0.0
    %403 = vmatprep.subr.mxu0 0.0
    %404 = vmatpush1.msra.mxu0 0.0
    %405 = vmatprep.subr.mxu0 0.0
    %406 = vmatpush1.msra.mxu0 0.0
    %407 = vmatprep.subr.mxu0 0.0
    %408 = vmatpush1.msra.mxu0 0.0
    %409 = vmatprep.subr.mxu0 0.0
    %410 = vmatpush1.msra.mxu0 0.0
    %411 = vmatprep.subr.mxu0 0.0
    %412 = vmatpush1.msra.mxu0 0.0
    %413 = vmatprep.subr.mxu0 0.0
    %414 = vmatpush1.msra.mxu0 0.0
    %415 = vmatprep.subr.mxu0 0.0
    %416 = vmatpush1.msra.mxu0 0.0
    %417 = vmatprep.subr.mxu0 0.0
    %418 = vmatpush1.msra.mxu0 0.0
    %419 = vmatprep.subr.mxu0 0.0
    %420 = vmatpush1.msra.mxu0 0.0
    %421 = vmatprep.subr.mxu0 0.0
    %422 = vmatpush1.msra.mxu0 0.0
    %423 = vmatprep.subr.mxu0 0.0
    %424 = vmatpush1.msra.mxu0 0.0
    %425 = vmatprep.subr.mxu0 0.0
    %426 = vmatpush1.msra.mxu0 0.0
    %427 = vmatprep.subr.mxu0 0.0
    %428 = vmatpush1.msra.mxu0 0.0
    %429 = vmatprep.mubr.f32.mxu0 0.0
    %430 = vmatmul.mubr.f32.gmra.mrb[0].mxu0 %v318
    %v431 = vpop.f32.mrb[0].mxu0
    %v432 = vadd.f32 %v314, %v431
    %v433 = vpop.f32.mrb[0].mxu0
    %434 = vmatprep.mubr.f32.mxu0 0.0
    %435 = vmatmul.mubr.f32.gmra.mrb[0].mxu0 %v321
    %v436 = vpop.f32.mrb[0].mxu0
    %v437 = vadd.f32 %v314, %v436
    %v438 = vpop.f32.mrb[0].mxu0
    %439 = vmatprep.mubr.f32.mxu0 0.0
    %440 = vmatmul.mubr.f32.gmra.mrb[0].mxu0 %v324
    %v441 = vpop.f32.mrb[0].mxu0
    %v442 = vadd.f32 %v314, %v441
    %v443 = vpop.f32.mrb[0].mxu0
    %444 = vmatprep.mubr.f32.mxu0 0.0
    %445 = vmatmul.mubr.f32.gmra.mrb[0].mxu0 %v327
    %v446 = vpop.f32.mrb[0].mxu0
    %v447 = vadd.f32 %v314, %v446
    %v448 = vpop.f32.mrb[0].mxu0
    %449 = vmatprep.mubr.f32.mxu0 0.0
    %450 = vmatmul.mubr.f32.gmra.mrb[0].mxu0 %v330
    %v451 = vpop.f32.mrb[0].mxu0
    %v452 = vadd.f32 %v314, %v451
    %v453 = vpop.f32.mrb[0].mxu0
    %454 = vmatprep.mubr.f32.mxu0 0.0
    %455 = vmatmul.mubr.f32.gmra.mrb[0].mxu0 %v333
    %v456 = vpop.f32.mrb[0].mxu0
    %v457 = vadd.f32 %v314, %v456
    %v458 = vpop.f32.mrb[0].mxu0
    %459 = vmatprep.mubr.f32.mxu0 0.0
    %460 = vmatmul.mubr.f32.gmra.mrb[0].mxu0 %v336
    %v461 = vpop.f32.mrb[0].mxu0
    %v462 = vadd.f32 %v314, %v461
    %v463 = vpop.f32.mrb[0].mxu0
    %464 = vmatprep.mubr.f32.mxu0 0.0
    %465 = vmatmul.mubr.f32.gmra.mrb[0].mxu0 %v339
    %v466 = vpop.f32.mrb[0].mxu0
    %v467 = vadd.f32 %v314, %v466
    %v468 = vpop.f32.mrb[0].mxu0
    %469 = vmatprep.mubr.f32.mxu0 0.0
    %470 = vmatmul.mubr.f32.gmra.mrb[0].mxu0 %v342
    %v471 = vpop.f32.mrb[0].mxu0
    %v472 = vadd.f32 %v314, %v471
    %v473 = vpop.f32.mrb[0].mxu0
    %474 = vmatprep.mubr.f32.mxu0 0.0
    %475 = vmatmul.mubr.f32.gmra.mrb[0].mxu0 %v345
    %v476 = vpop.f32.mrb[0].mxu0
    %v477 = vadd.f32 %v314, %v476
    %v478 = vpop.f32.mrb[0].mxu0
    %479 = vmatprep.mubr.f32.mxu0 0.0
    %480 = vmatmul.mubr.f32.gmra.mrb[0].mxu0 %v348
    %v481 = vpop.f32.mrb[0].mxu0
    %v482 = vadd.f32 %v314, %v481
    %v483 = vpop.f32.mrb[0].mxu0
    %484 = vmatprep.mubr.f32.mxu0 0.0
    %485 = vmatmul.mubr.f32.gmra.mrb[0].mxu0 %v351
    %v486 = vpop.f32.mrb[0].mxu0
    %v487 = vadd.f32 %v314, %v486
    %v488 = vpop.f32.mrb[0].mxu0
    %489 = vmatprep.mubr.f32.mxu0 0.0
    %490 = vmatmul.mubr.f32.gmra.mrb[0].mxu0 %v354
    %v491 = vpop.f32.mrb[0].mxu0
    %v492 = vadd.f32 %v314, %v491
    %v493 = vpop.f32.mrb[0].mxu0
    %494 = vmatprep.mubr.f32.mxu0 0.0
    %495 = vmatmul.mubr.f32.gmra.mrb[0].mxu0 %v357
    %v496 = vpop.f32.mrb[0].mxu0
    %v497 = vadd.f32 %v314, %v496
    %v498 = vpop.f32.mrb[0].mxu0
    %499 = vmatprep.mubr.f32.mxu0 0.0
    %500 = vmatmul.mubr.f32.gmra.mrb[0].mxu0 %v360
    %v501 = vpop.f32.mrb[0].mxu0
    %v502 = vadd.f32 %v314, %v501
    %v503 = vpop.f32.mrb[0].mxu0
    %504 = vmatprep.mubr.f32.mxu0 0.0
    %505 = vmatmul.mubr.f32.gmra.mrb[0].mxu0 %v363
    %v506 = vpop.f32.mrb[0].mxu0
    %v507 = vadd.f32 %v314, %v506
    %v508 = vpop.f32.mrb[0].mxu0
    %509 = vdwg.mxu0
    %v510 = vmax.f32 %v432, 0.0
    %v511 = vmax.f32 %v437, 0.0
    %v512 = vmax.f32 %v442, 0.0
    %v513 = vmax.f32 %v447, 0.0
    %v514 = vmax.f32 %v452, 0.0
    %v515 = vmax.f32 %v457, 0.0
    %v516 = vmax.f32 %v462, 0.0
    %v517 = vmax.f32 %v467, 0.0
    %v518 = vmax.f32 %v472, 0.0
    %v519 = vmax.f32 %v477, 0.0
    %v520 = vmax.f32 %v482, 0.0
    %v521 = vmax.f32 %v487, 0.0
    %v522 = vmax.f32 %v492, 0.0
    %v523 = vmax.f32 %v497, 0.0
    %v524 = vmax.f32 %v502, 0.0
    %v525 = vmax.f32 %v507, 0.0
    %v526 = vld [vmem:[%s5] sm:$0x1]
    %v527 = vld [vmem:[#allocation2] sm:$0x1]
    %529 = vset.pattern.permute.xlu0 0
    %530 = vperm.xlu0 %529, %v527
    %v531 = vpop.permute.xlu0 %530
    %v533 = vlaneseq
    %v534 = vshrl.u32 %v533, 7
    %v535 = vsub.s32 0, %v534
    %v536 = vrot.slane %v531, %v535
    %v538 = vsel %vm316, %v526, 0
    %v541 = vsel %vm316, %v510, 0
    %v544 = vsel %vm316, %v511, 0
    %v547 = vsel %vm316, %v512, 0
    %v550 = vsel %vm316, %v513, 0
    %v553 = vsel %vm316, %v514, 0
    %v556 = vsel %vm316, %v515, 0
    %v559 = vsel %vm316, %v516, 0
    %v562 = vsel %vm316, %v517, 0
    %v565 = vsel %vm316, %v518, 0
    %v568 = vsel %vm316, %v519, 0
    %v571 = vsel %vm316, %v520, 0
    %v574 = vsel %vm316, %v521, 0
    %v577 = vsel %vm316, %v522, 0
    %v580 = vsel %vm316, %v523, 0
    %v583 = vsel %vm316, %v524, 0
    %v586 = vsel %vm316, %v525, 0
    %588 = vmatprep.subr.mxu0 0.0
    %589 = vmatpush1.xpose.msra.mxu0 %v541
    %590 = vmatprep.subr.mxu0 0.0
    %591 = vmatpush1.xpose.msra.mxu0 %v544
    %592 = vmatprep.subr.mxu0 0.0
    %593 = vmatpush1.xpose.msra.mxu0 %v547
    %594 = vmatprep.subr.mxu0 0.0
    %595 = vmatpush1.xpose.msra.mxu0 %v550
    %596 = vmatprep.subr.mxu0 0.0
    %597 = vmatpush1.xpose.msra.mxu0 %v553
    %598 = vmatprep.subr.mxu0 0.0
    %599 = vmatpush1.xpose.msra.mxu0 %v556
    %600 = vmatprep.subr.mxu0 0.0
    %601 = vmatpush1.xpose.msra.mxu0 %v559
    %602 = vmatprep.subr.mxu0 0.0
    %603 = vmatpush1.xpose.msra.mxu0 %v562
    %604 = vmatprep.subr.mxu0 0.0
    %605 = vmatpush1.xpose.msra.mxu0 %v565
    %606 = vmatprep.subr.mxu0 0.0
    %607 = vmatpush1.xpose.msra.mxu0 %v568
    %608 = vmatprep.subr.mxu0 0.0
    %609 = vmatpush1.xpose.msra.mxu0 %v571
    %610 = vmatprep.subr.mxu0 0.0
    %611 = vmatpush1.xpose.msra.mxu0 %v574
    %612 = vmatprep.subr.mxu0 0.0
    %613 = vmatpush1.xpose.msra.mxu0 %v577
    %614 = vmatprep.subr.mxu0 0.0
    %615 = vmatpush1.xpose.msra.mxu0 %v580
    %616 = vmatprep.subr.mxu0 0.0
    %617 = vmatpush1.xpose.msra.mxu0 %v583
    %618 = vmatprep.subr.mxu0 0.0
    %619 = vmatpush1.xpose.msra.mxu0 %v586
    %620 = vmatprep.subr.mxu0 0.0
    %621 = vmatpush1.xpose.msra.mxu0 0.0
    %622 = vmatprep.subr.mxu0 0.0
    %623 = vmatpush1.xpose.msra.mxu0 0.0
    %624 = vmatprep.subr.mxu0 0.0
    %625 = vmatpush1.xpose.msra.mxu0 0.0
    %626 = vmatprep.subr.mxu0 0.0
    %627 = vmatpush1.xpose.msra.mxu0 0.0
    %628 = vmatprep.subr.mxu0 0.0
    %629 = vmatpush1.xpose.msra.mxu0 0.0
    %630 = vmatprep.subr.mxu0 0.0
    %631 = vmatpush1.xpose.msra.mxu0 0.0
    %632 = vmatprep.subr.mxu0 0.0
    %633 = vmatpush1.xpose.msra.mxu0 0.0
    %634 = vmatprep.subr.mxu0 0.0
    %635 = vmatpush1.xpose.msra.mxu0 0.0
    %636 = vmatprep.subr.mxu0 0.0
    %637 = vmatpush1.xpose.msra.mxu0 0.0
    %638 = vmatprep.subr.mxu0 0.0
    %639 = vmatpush1.xpose.msra.mxu0 0.0
    %640 = vmatprep.subr.mxu0 0.0
    %641 = vmatpush1.xpose.msra.mxu0 0.0
    %642 = vmatprep.subr.mxu0 0.0
    %643 = vmatpush1.xpose.msra.mxu0 0.0
    %644 = vmatprep.subr.mxu0 0.0
    %645 = vmatpush1.xpose.msra.mxu0 0.0
    %646 = vmatprep.subr.mxu0 0.0
    %647 = vmatpush1.xpose.msra.mxu0 0.0
    %648 = vmatprep.subr.mxu0 0.0
    %649 = vmatpush1.xpose.msra.mxu0 0.0
    %650 = vmatprep.subr.mxu0 0.0
    %651 = vmatpush1.xpose.msra.mxu0 0.0
    %652 = vmatprep.mubr.f32.mxu0 0.0
    %653 = vmatmul.mubr.f32.gmra.mrb[0].mxu0 %v538
    %v654 = vpop.f32.mrb[0].mxu0
    %v655 = vadd.f32 %v536, %v654
    %v656 = vpop.f32.mrb[0].mxu0
    %657 = vdwg.mxu0
    %658 = vst [vmem:[#allocation9] sm:$0x1] %v655
    // Predicated region
    $region42: #{tpu_custom_call.1} parent=1 // pred_check
      _
    $region43: #{tpu_custom_call.1} parent=1 // pred_check_branch
      %660 = sbr.rel (0) target = $region45
    $region44: #{tpu_custom_call.1} parent=1 // pred_region
      %s662 = ssub.s32 16, 16
      %663 = vsyncadd [#allocation5], %s662
      %s665 = sshll.u32 [#allocation9], 4
      %s666 = int_to_ptr.vmem [resolvable:$true] %s665
      %668 = dma.vmem_to_hbm [thread:$0]  %s666, 16, %s7, [#allocation5]
    $region45: #{tpu_custom_call.1} parent=1 // pred_fallthru
      _
    // Predicated region
    $region46: #{tpu_custom_call.1} parent=1 // pred_check
      _
    $region47: #{tpu_custom_call.1} parent=1 // pred_check_branch
      %670 = sbr.rel (0) target = $region49
    $region48: #{tpu_custom_call.1} parent=1 // pred_region
      %671 = dma.done [#allocation5], 16
    $region49: #{tpu_custom_call.1} parent=1 // pred_fallthru
      _
    %672 = vsyncpa [#allocation4], 1
    %673 = vsyncpa [#allocation7], 1
    %674 = vsyncpa [#allocation5], 1

</llo_original>
